<compile_context>
chip_gen: v6e
topology: v6e:2x2x1
jax: 0.10.0
libtpu: 0.0.40
codegen_flags: <defaults>
</compile_context>

<pallas_src>
import functools

import jax
import jax.numpy as jnp
from jax.experimental import pallas as pl
from jax.experimental.pallas import tpu as pltpu


# ------------------------- configuration (small) -------------------------
BATCH = 2
SEQ = 8
CONV_DIM_LAST = 64        # config.conv_dim[-1]
HIDDEN = 32               # config.hidden_size
LN_EPS = 1e-5


# ------------------------------- kernel ----------------------------------
def feature_projection_kernel(
    x_ref,        # (row_tile, C)
    ln_g_ref,     # (1, C)
    ln_b_ref,     # (1, C)
    w_ref,        # (C, H)   (possibly bf16/fp8)
    b_ref,        # (1, H)
    o_ref,        # (row_tile, H)
    *, eps, use_layer_norm, matmul_dtype,
):
    x = x_ref[...].astype(jnp.float32)                        # (rows, C)

    if use_layer_norm:
        mu = jnp.mean(x, axis=-1, keepdims=True)
        xc = x - mu
        var = jnp.mean(xc * xc, axis=-1, keepdims=True)
        # rsqrt lowers to the EUP slot; multiply instead of divide (VALU relief).
        x = xc * jax.lax.rsqrt(var + eps) * ln_g_ref[...] + ln_b_ref[...]

    if matmul_dtype is not None:
        # Weights were cast in the wrapper (once); only the LN output needs
        # a per-tile narrow cast before the MXU.  f32 accumulation below.
        x = x.astype(matmul_dtype)

    y = jnp.dot(x, w_ref[...], preferred_element_type=jnp.float32)
    y = y + b_ref[...].astype(jnp.float32)

    # Dropout is identity in eval mode.
    o_ref[...] = y.astype(o_ref.dtype)


# --------------------------- row-tile selection ----------------------------
def _round_up(x, m):
    return ((x + m - 1) // m) * m


def _choose_row_tile(n_rows, c, h, x_bytes, vmem_budget_bytes):
    """Largest MXU-friendly row tile whose double-buffered working set fits."""
    # Weights (w + ln params + bias), worst case double-buffered.
    weight_bytes = 2 * (c * h * 4 + 2 * c * 4 + h * 4)
    # Per-row cost: double-buffered x tile + double-buffered f32 output tile.
    per_row = 2 * c * x_bytes + 2 * h * 4
    avail = max(vmem_budget_bytes - weight_bytes, per_row * 8)
    max_rows = max(avail // per_row, 8)
    tile = min(1024, max_rows, _round_up(n_rows, 8))
    if tile >= 256:
        tile = (tile // 256) * 256      # fill the 256-wide MXU M dim (v6e/v7x)
    else:
        tile = max((tile // 8) * 8, 8)  # sublane multiple
    return int(tile)


# ------------------------------ wrapper -----------------------------------
def hubert_feature_projection(
    x, params, *, eps=LN_EPS, use_layer_norm=True, row_tile=None,
    matmul_dtype=None, vmem_budget_bytes=16 * 1024 * 1024, vmem_limit_bytes=None,
):
    B, T, C = x.shape
    H = params["w"].shape[1]
    N = B * T

    # Fold batch into the row (sublane) axis.  Plain reshape, no HBM copy.
    x2 = x.reshape(N, C)

    if row_tile is None:
        row_tile = _choose_row_tile(N, C, H, x2.dtype.itemsize, vmem_budget_bytes)
    row_tile = max(8, (row_tile // 8) * 8)

    # Ragged last block handled by Pallas (masked partial writes) — no jnp.pad
    # round-trip of the activation tensor.
    grid = (pl.cdiv(N, row_tile),)

    w = params["w"]
    if matmul_dtype is not None:
        # Cast once outside the kernel: halves weight DMA bytes and feeds the
        # MXU bf16/fp8 path; accumulation stays f32 inside the kernel.
        w = w.astype(matmul_dtype)

    # 2-D (1, C)/(1, H) layouts for clean lane-major broadcasts in-kernel.
    ln_g = params["ln_g"].reshape(1, C)
    ln_b = params["ln_b"].reshape(1, C)
    b = params["b"].reshape(1, H)

    kernel = functools.partial(
        feature_projection_kernel,
        eps=eps,
        use_layer_norm=use_layer_norm,
        matmul_dtype=matmul_dtype,
    )

    def const_spec(arr):
        nd = arr.ndim
        return pl.BlockSpec(arr.shape, lambda i, _nd=nd: (0,) * _nd)

    out = pl.pallas_call(
        kernel,
        out_shape=jax.ShapeDtypeStruct((N, H), x.dtype),
        grid=grid,
        in_specs=[pl.BlockSpec((row_tile, C), lambda i: (i, 0)),
                  const_spec(ln_g), const_spec(ln_b), const_spec(w), const_spec(b)],
        out_specs=pl.BlockSpec((row_tile, H), lambda i: (i, 0)),
        compiler_params=pltpu.CompilerParams(
            dimension_semantics=("parallel",),
            vmem_limit_bytes=vmem_limit_bytes,
        ),
    )(x2, ln_g, ln_b, w, b)

    return out.reshape(B, T, H)


# --------------------------- param construction ---------------------------
def init_params(key, c_in, hidden):
    k_w, k_b = jax.random.split(key)
    scale = 0.02
    return {
        "ln_g": jnp.ones((c_in,), jnp.float32),
        "ln_b": jnp.zeros((c_in,), jnp.float32),
        # Stored as (in_features, out_features): y = x @ w + b
        # (equivalent to PyTorch Linear's x @ W.T + b).
        "w": (scale * jax.random.normal(k_w, (c_in, hidden))).astype(jnp.float32),
        "b": (scale * jax.random.normal(k_b, (hidden,))).astype(jnp.float32),
    }


# ------------------------ pure-JAX reference check ------------------------
def reference(x, p, *, eps=LN_EPS, use_layer_norm=True):
    h = x
    if use_layer_norm:
        mu = jnp.mean(h, axis=-1, keepdims=True)
        var = jnp.mean((h - mu) ** 2, axis=-1, keepdims=True)
        h = (h - mu) / jnp.sqrt(var + eps) * p["ln_g"] + p["ln_b"]
    return h @ p["w"] + p["b"]   # dropout = identity in eval


# --------------------------------- main ------------------------------------
if __name__ == "__main__":
    key = jax.random.PRNGKey(0)
    kx, kp = jax.random.split(key)
    x = jax.random.normal(kx, (BATCH, SEQ, CONV_DIM_LAST), dtype=jnp.float32)
    params = init_params(kp, CONV_DIM_LAST, HIDDEN)

    # f32 path for the tight tolerance check; pass matmul_dtype=jnp.bfloat16 at
    # real Hubert sizes on v6e/v7x (then relax the tolerance accordingly).
    out = hubert_feature_projection(x, params, use_layer_norm=True)
    out = jax.block_until_ready(out)

    ref = jax.block_until_ready(reference(x, params, use_layer_norm=True))
    assert out.shape == (BATCH, SEQ, HIDDEN)
    assert jnp.allclose(out, ref, atol=1e-4, rtol=1e-4), "mismatch vs reference"

    # TODO(synk): nn.Dropout's stochastic training path is not implemented
    # (eval-mode identity only), matching the module's inference semantics.

    print("KERNEL_OK")
</pallas_src>

<mosaic_0001>
module attributes {stable_mosaic.version = 11 : i64} {
  func.func @feature_projection_kernel(%arg0: i32, %arg1: memref<16x64xf32, #tpu.memory_space<vmem>>, %arg2: memref<1x64xf32, #tpu.memory_space<vmem>>, %arg3: memref<1x64xf32, #tpu.memory_space<vmem>>, %arg4: memref<64x32xf32, #tpu.memory_space<vmem>>, %arg5: memref<1x32xf32, #tpu.memory_space<vmem>>, %arg6: memref<16x32xf32, #tpu.memory_space<vmem>>) attributes {dimension_semantics = [#tpu.dimension_semantics<parallel>], iteration_bounds = array<i64: 1>, scalar_prefetch = 0 : i64, scratch_operands = 0 : i64, tpu.core_type = #tpu.core_type<tc>, window_params = [{transform_indices = @transform_0, window_bounds = array<i64: 16, 64>}, {pipeline_mode = #tpu.pipeline_mode<synchronous>, transform_indices = @transform_1, window_bounds = array<i64: 1, 64>}, {pipeline_mode = #tpu.pipeline_mode<synchronous>, transform_indices = @transform_2, window_bounds = array<i64: 1, 64>}, {pipeline_mode = #tpu.pipeline_mode<synchronous>, transform_indices = @transform_3, window_bounds = array<i64: 64, 32>}, {pipeline_mode = #tpu.pipeline_mode<synchronous>, transform_indices = @transform_4, window_bounds = array<i64: 1, 32>}, {transform_indices = @transform_5, window_bounds = array<i64: 16, 32>}]} {
    %c0 = arith.constant 0 : index
    %c0_0 = arith.constant 0 : index
    %0 = vector.load %arg1[%c0, %c0_0] : memref<16x64xf32, #tpu.memory_space<vmem>>, vector<16x64xf32>
    %cst = arith.constant dense<0.000000e+00> : vector<16xf32>
    %1 = vector.multi_reduction <add>, %0, %cst [1] : vector<16x64xf32> to vector<16xf32>
    %2 = vector.shape_cast %1 : vector<16xf32> to vector<16x1xf32>
    %cst_1 = arith.constant 6.400000e+01 : f32
    %3 = vector.broadcast %cst_1 : f32 to vector<16x1xf32>
    %4 = arith.divf %2, %3 : vector<16x1xf32>
    %5 = vector.broadcast %4 : vector<16x1xf32> to vector<16x64xf32>
    %6 = arith.subf %0, %5 : vector<16x64xf32>
    %7 = arith.mulf %6, %6 : vector<16x64xf32>
    %cst_2 = arith.constant dense<0.000000e+00> : vector<16xf32>
    %8 = vector.multi_reduction <add>, %7, %cst_2 [1] : vector<16x64xf32> to vector<16xf32>
    %9 = vector.shape_cast %8 : vector<16xf32> to vector<16x1xf32>
    %cst_3 = arith.constant 6.400000e+01 : f32
    %10 = vector.broadcast %cst_3 : f32 to vector<16x1xf32>
    %11 = arith.divf %9, %10 : vector<16x1xf32>
    %cst_4 = arith.constant 9.99999974E-6 : f32
    %12 = vector.broadcast %cst_4 : f32 to vector<16x1xf32>
    %13 = arith.addf %11, %12 : vector<16x1xf32>
    %14 = math.rsqrt %13 : vector<16x1xf32>
    %15 = vector.broadcast %14 : vector<16x1xf32> to vector<16x64xf32>
    %16 = arith.mulf %6, %15 : vector<16x64xf32>
    %c0_5 = arith.constant 0 : index
    %c0_6 = arith.constant 0 : index
    %17 = vector.load %arg2[%c0_5, %c0_6] : memref<1x64xf32, #tpu.memory_space<vmem>>, vector<1x64xf32>
    %18 = vector.broadcast %17 : vector<1x64xf32> to vector<16x64xf32>
    %19 = arith.mulf %16, %18 : vector<16x64xf32>
    %c0_7 = arith.constant 0 : index
    %c0_8 = arith.constant 0 : index
    %20 = vector.load %arg3[%c0_7, %c0_8] : memref<1x64xf32, #tpu.memory_space<vmem>>, vector<1x64xf32>
    %21 = vector.broadcast %20 : vector<1x64xf32> to vector<16x64xf32>
    %22 = arith.addf %19, %21 : vector<16x64xf32>
    %c0_9 = arith.constant 0 : index
    %c0_10 = arith.constant 0 : index
    %23 = vector.load %arg4[%c0_9, %c0_10] : memref<64x32xf32, #tpu.memory_space<vmem>>, vector<64x32xf32>
    %cst_11 = arith.constant dense<0.000000e+00> : vector<16x32xf32>
    %24 = tpu.matmul %22, %23, %cst_11 {dimension_numbers = #tpu.dot_dimension_numbers<[1], [0], [0], [1], [0, 0, 1, 1], [], []>} : vector<16x64xf32>, vector<64x32xf32>, vector<16x32xf32> -> vector<16x32xf32>
    %c0_12 = arith.constant 0 : index
    %c0_13 = arith.constant 0 : index
    %25 = vector.load %arg5[%c0_12, %c0_13] : memref<1x32xf32, #tpu.memory_space<vmem>>, vector<1x32xf32>
    %26 = vector.broadcast %25 : vector<1x32xf32> to vector<16x32xf32>
    %27 = arith.addf %24, %26 : vector<16x32xf32>
    %c0_14 = arith.constant 0 : index
    %c0_15 = arith.constant 0 : index
    %28 = vector.load %arg6[%c0_14, %c0_15] : memref<16x32xf32, #tpu.memory_space<vmem>>, vector<16x32xf32>
    tpu.vector_store %arg6[%c0_14, %c0_15], %27 {strides = array<i32>} : memref<16x32xf32, #tpu.memory_space<vmem>>, vector<16x32xf32>,
    return
  }
  func.func @transform_0(%arg0: i32) -> (i32, i32) {
    %c0_i32 = arith.constant 0 : i32
    %c0_i32_0 = arith.constant 0 : i32
    return %arg0, %c0_i32 : i32, i32
  }
  func.func @transform_1(%arg0: i32) -> (i32, i32) {
    %c0_i32 = arith.constant 0 : i32
    %c0_i32_0 = arith.constant 0 : i32
    %c0_i32_1 = arith.constant 0 : i32
    return %c0_i32, %c0_i32_0 : i32, i32
  }
  func.func @transform_2(%arg0: i32) -> (i32, i32) {
    %c0_i32 = arith.constant 0 : i32
    %c0_i32_0 = arith.constant 0 : i32
    %c0_i32_1 = arith.constant 0 : i32
    return %c0_i32, %c0_i32_0 : i32, i32
  }
  func.func @transform_3(%arg0: i32) -> (i32, i32) {
    %c0_i32 = arith.constant 0 : i32
    %c0_i32_0 = arith.constant 0 : i32
    %c0_i32_1 = arith.constant 0 : i32
    return %c0_i32, %c0_i32_0 : i32, i32
  }
  func.func @transform_4(%arg0: i32) -> (i32, i32) {
    %c0_i32 = arith.constant 0 : i32
    %c0_i32_0 = arith.constant 0 : i32
    %c0_i32_1 = arith.constant 0 : i32
    return %c0_i32, %c0_i32_0 : i32, i32
  }
  func.func @transform_5(%arg0: i32) -> (i32, i32) {
    %c0_i32 = arith.constant 0 : i32
    %c0_i32_0 = arith.constant 0 : i32
    return %arg0, %c0_i32 : i32, i32
  }
}

</mosaic_0001>

<llo_original>
// kernel: tpu_custom_call.1
$region0: #{tpu_custom_call.1}
  #allocation0 [shape = 'u32[]', space=smem, size = 0x4, offset = 0x4, fixed_abs, tag = 'smem constant byte address 0x4 - core index']
  #allocation1 [shape = 'u32[144,128]{1,0:T(1,128)}', space=vmem, size = 0x12000, scoped, tag = 'internal scratch']
  %s0 = inlined_call_operand.vmem [shape: f32[16,64], index: 0, kind: input, shape index: {}]
  %s1 = inlined_call_operand.vmem [shape: f32[1,64], index: 1, kind: input, shape index: {}]
  %s2 = inlined_call_operand.vmem [shape: f32[1,64], index: 2, kind: input, shape index: {}]
  %s3 = inlined_call_operand.vmem [shape: f32[64,32], index: 3, kind: input, shape index: {}]
  %s4 = inlined_call_operand.vmem [shape: f32[1,32], index: 4, kind: input, shape index: {}]
  %s5 = inlined_call_operand.hbm [shape: f32[16,32], index: 5, kind: output, shape index: {}]
  %s6 = sld [smem:[#allocation0]]
  $region30: #{tpu_custom_call.1} parent=0
    _
  %s8 = ssub.s32 1, %s6
  %s9 = scalar_select 0, %s8, %s6
  $region1: #{tpu_custom_call.1} parent=0
    #allocation2 [shape = 'u8[8192]{0}', space=vmem, size = 0x2000, scoped, tag = 'output window, operand 0, single buffered']
    #allocation3 [shape = 's32[1]{0}', space=sflag, size = 0x4, scoped, tag = 'scoped memory for tpu_custom_call.1']
    %10 = vsyncpa [#allocation3], 0
    // Predicated region
    $region2: #{tpu_custom_call.1} parent=1 // pred_check
      _
    $region3: #{tpu_custom_call.1} parent=1 // pred_check_branch
      %12 = sbr.rel (0) target = $region5
    $region4: #{tpu_custom_call.1} parent=1 // pred_region
      _
    $region5: #{tpu_custom_call.1} parent=1 // pred_fallthru
      _
    // Predicated region
    $region6: #{tpu_custom_call.1} parent=1 // pred_check
      _
    $region7: #{tpu_custom_call.1} parent=1 // pred_check_branch
      %14 = sbr.rel (0) target = $region9
    $region8: #{tpu_custom_call.1} parent=1 // pred_region
      _
    $region9: #{tpu_custom_call.1} parent=1 // pred_fallthru
      _
    // Predicated region
    $region10: #{tpu_custom_call.1} parent=1 // pred_check
      _
    $region11: #{tpu_custom_call.1} parent=1 // pred_check_branch
      %16 = sbr.rel (0) target = $region13
    $region12: #{tpu_custom_call.1} parent=1 // pred_region
      _
    $region13: #{tpu_custom_call.1} parent=1 // pred_fallthru
      _
    // Predicated region
    $region14: #{tpu_custom_call.1} parent=1 // pred_check
      _
    $region15: #{tpu_custom_call.1} parent=1 // pred_check_branch
      %18 = sbr.rel (0) target = $region17
    $region16: #{tpu_custom_call.1} parent=1 // pred_region
      _
    $region17: #{tpu_custom_call.1} parent=1 // pred_fallthru
      _
    // Predicated region
    $region18: #{tpu_custom_call.1} parent=1 // pred_check
      _
    $region19: #{tpu_custom_call.1} parent=1 // pred_check_branch
      %20 = sbr.rel (0) target = $region21
    $region20: #{tpu_custom_call.1} parent=1 // pred_region
      _
    $region21: #{tpu_custom_call.1} parent=1 // pred_fallthru
      _
    %v21 = vld [vmem:[%s0] sm:$0xff]
    %v22 = vld [vmem:[%s0 + $0x8] sm:$0xff]
    %vm23 = vcmask 523264
    %v24 = vsel %vm23, %v21, 0.0
    %25 = vadd.xlane.f32.xlu0 %v24
    %v26 = vpop.xlane.xlu0 %25
    %v27 = vsel %vm23, %v22, 0.0
    %28 = vadd.xlane.f32.xlu0 %v27
    %v29 = vpop.xlane.xlu0 %28
    %v30 = vrcp.pop 64.0
    %v31 = vmul.f32 %v26, %v30
    %v32 = vmul.f32 %v29, %v30
    %v33 = vsub.f32 %v21, %v31
    %v34 = vsub.f32 %v22, %v32
    %v35 = vmul.f32 %v33, %v33
    %v36 = vmul.f32 %v34, %v34
    %v37 = vsel %vm23, %v35, 0.0
    %38 = vadd.xlane.f32.xlu0 %v37
    %v39 = vpop.xlane.xlu0 %38
    %v40 = vsel %vm23, %v36, 0.0
    %41 = vadd.xlane.f32.xlu0 %v40
    %v42 = vpop.xlane.xlu0 %41
    %v43 = vmul.f32 %v39, %v30
    %v44 = vmul.f32 %v42, %v30
    %v45 = vadd.f32 %v43, 1e-05
    %v46 = vadd.f32 %v44, 1e-05
    %v47 = vrsqrt.pop %v45
    %v48 = vrsqrt.pop %v46
    %v49 = vmul.f32 %v33, %v47
    %v50 = vmul.f32 %v34, %v48
    %v51 = vld [vmem:[%s1] sm:$0x1]
    %v53 = vlaneseq
    %v54 = vshrl.u32 %v53, 7
    %v55 = vsub.s32 0, %v54
    %v56 = vrot.slane %v51, %v55
    %v58 = vmul.f32 %v49, %v56
    %v59 = vmul.f32 %v50, %v56
    %v60 = vld [vmem:[%s2] sm:$0x1]
    %v62 = vlaneseq
    %v63 = vshrl.u32 %v62, 7
    %v64 = vsub.s32 0, %v63
    %v65 = vrot.slane %v60, %v64
    %v67 = vadd.f32 %v58, %v65
    %v68 = vadd.f32 %v59, %v65
    %v69 = vld [vmem:[%s3] sm:$0xff]
    %v70 = vld [vmem:[%s3 + $0x8] sm:$0xff]
    %v71 = vld [vmem:[%s3 + $0x10] sm:$0xff]
    %v72 = vld [vmem:[%s3 + $0x18] sm:$0xff]
    %v73 = vld [vmem:[%s3 + $0x20] sm:$0xff]
    %v74 = vld [vmem:[%s3 + $0x28] sm:$0xff]
    %v75 = vld [vmem:[%s3 + $0x30] sm:$0xff]
    %v76 = vld [vmem:[%s3 + $0x38] sm:$0xff]
    %v77 = vld [vmem:[%s4] sm:$0x1]
    %v79 = vlaneseq
    %v80 = vshrl.u32 %v79, 7
    %v81 = vsub.s32 0, %v80
    %v82 = vrot.slane %v77, %v81
    %v85 = vsel %vm23, %v67, 0
    %v88 = vsel %vm23, %v68, 0
    %90 = vmatprep.subr.mxu0 0.0
    %91 = vmatpush1.msra.mxu0 0.0
    %92 = vmatprep.subr.mxu0 0.0
    %93 = vmatpush1.msra.mxu0 0.0
    %94 = vmatprep.subr.mxu0 0.0
    %95 = vmatpush1.msra.mxu0 0.0
    %96 = vmatprep.subr.mxu0 0.0
    %97 = vmatpush1.msra.mxu0 0.0
    %98 = vmatprep.subr.mxu0 0.0
    %99 = vmatpush1.msra.mxu0 0.0
    %100 = vmatprep.subr.mxu0 0.0
    %101 = vmatpush1.msra.mxu0 0.0
    %102 = vmatprep.subr.mxu0 0.0
    %103 = vmatpush1.msra.mxu0 0.0
    %104 = vmatprep.subr.mxu0 0.0
    %105 = vmatpush1.msra.mxu0 0.0
    %106 = vmatprep.subr.mxu0 0.0
    %107 = vmatpush1.msra.mxu0 %v76
    %108 = vmatprep.subr.mxu0 0.0
    %109 = vmatpush1.msra.mxu0 %v75
    %110 = vmatprep.subr.mxu0 0.0
    %111 = vmatpush1.msra.mxu0 %v74
    %112 = vmatprep.subr.mxu0 0.0
    %113 = vmatpush1.msra.mxu0 %v73
    %114 = vmatprep.subr.mxu0 0.0
    %115 = vmatpush1.msra.mxu0 %v72
    %116 = vmatprep.subr.mxu0 0.0
    %117 = vmatpush1.msra.mxu0 %v71
    %118 = vmatprep.subr.mxu0 0.0
    %119 = vmatpush1.msra.mxu0 %v70
    %120 = vmatprep.subr.mxu0 0.0
    %121 = vmatpush1.msra.mxu0 %v69
    %122 = vmatprep.subr.mxu0 0.0
    %123 = vmatpush2.msra.mxu0 0.0
    %124 = vmatprep.subr.mxu0 0.0
    %125 = vmatpush2.msra.mxu0 0.0
    %126 = vmatprep.subr.mxu0 0.0
    %127 = vmatpush2.msra.mxu0 0.0
    %128 = vmatprep.subr.mxu0 0.0
    %129 = vmatpush2.msra.mxu0 0.0
    %130 = vmatprep.subr.mxu0 0.0
    %131 = vmatpush2.msra.mxu0 0.0
    %132 = vmatprep.subr.mxu0 0.0
    %133 = vmatpush2.msra.mxu0 0.0
    %134 = vmatprep.subr.mxu0 0.0
    %135 = vmatpush2.msra.mxu0 0.0
    %136 = vmatprep.subr.mxu0 0.0
    %137 = vmatpush2.msra.mxu0 0.0
    %138 = vmatprep.subr.mxu0 0.0
    %139 = vmatpush2.msra.mxu0 0.0
    %140 = vmatprep.subr.mxu0 0.0
    %141 = vmatpush2.msra.mxu0 0.0
    %142 = vmatprep.subr.mxu0 0.0
    %143 = vmatpush2.msra.mxu0 0.0
    %144 = vmatprep.subr.mxu0 0.0
    %145 = vmatpush2.msra.mxu0 0.0
    %146 = vmatprep.subr.mxu0 0.0
    %147 = vmatpush2.msra.mxu0 0.0
    %148 = vmatprep.subr.mxu0 0.0
    %149 = vmatpush2.msra.mxu0 0.0
    %150 = vmatprep.subr.mxu0 0.0
    %151 = vmatpush2.msra.mxu0 0.0
    %152 = vmatprep.subr.mxu0 0.0
    %153 = vmatpush2.msra.mxu0 0.0
    %154 = vmatprep.mubr.f32.mxu0 0.0
    %155 = vmatmul.mubr.f32.gmra.mxu0 %v85
    %v156 = vpop.f32.mrf.mxu0
    %v157 = vadd.f32 %v82, %v156
    %v158 = vpop.f32.mrf.mxu0
    %159 = vmatprep.mubr.f32.mxu0 0.0
    %160 = vmatmul.mubr.f32.gmra.mxu0 %v88
    %v161 = vpop.f32.mrf.mxu0
    %v162 = vadd.f32 %v82, %v161
    %v163 = vpop.f32.mrf.mxu0
    %164 = vdwg.mxu0
    %vm165 = vcmask 261120
    %166 = vst.msk [vmem:[#allocation2] sm:$0xff] %vm165, %v157
    %167 = vst.msk [vmem:[#allocation2 + $0x8] sm:$0xff] %vm165, %v162
    // Predicated region
    $region22: #{tpu_custom_call.1} parent=1 // pred_check
      _
    $region23: #{tpu_custom_call.1} parent=1 // pred_check_branch
      %169 = sbr.rel (0) target = $region25
    $region24: #{tpu_custom_call.1} parent=1 // pred_region
      %s171 = ssub.s32 256, 256
      %172 = vsyncadd [#allocation3], %s171
      %s173 = sshll.u32 [#allocation2], 4
      %s174 = int_to_ptr.vmem [resolvable:$true] %s173
      %179 = dma.vmem_to_hbm [thread:$0]  %s174, 256, %s5, [#allocation3], 128, 128, 8
    $region25: #{tpu_custom_call.1} parent=1 // pred_fallthru
      _
    // Predicated region
    $region26: #{tpu_custom_call.1} parent=1 // pred_check
      _
    $region27: #{tpu_custom_call.1} parent=1 // pred_check_branch
      %181 = sbr.rel (0) target = $region29
    $region28: #{tpu_custom_call.1} parent=1 // pred_region
      %182 = dma.done [#allocation3], 256
    $region29: #{tpu_custom_call.1} parent=1 // pred_fallthru
      _
    %183 = vsyncpa [#allocation3], 1

</llo_original>
